<compile_context>
chip_gen: v7x
topology: tpu7x:2x2x1
jax: 0.10.0
libtpu: 0.0.40
codegen_flags: <defaults>
</compile_context>

<pallas_src>
import jax
import jax.numpy as jnp
from jax.experimental import pallas as pl
from jax.experimental.pallas import tpu as pltpu


def _packed_softmax_kernel(x_ref, w_ref, b_ref, o_ref):
    # x_ref: (tb4, K)   packed activations, P original rows per packed row
    # w_ref: (K, 2P)    block-diagonal signed-difference projection (resident)
    # b_ref: (1, 2P)    signed bias differences (resident)
    # o_ref: (tb4, 2P)  softmax probabilities, [p0, p1] interleaved per row
    zd = jnp.dot(x_ref[...], w_ref[...], preferred_element_type=jnp.float32)
    zd = zd + b_ref[...]                       # z_c - z_{1-c} for every column

    # Exact 2-class softmax: softmax_c = sigmoid(z_c - z_{1-c}), stable form.
    e = jnp.exp(-jnp.abs(zd))                  # EUP
    s = 1.0 / (1.0 + e)                        # exact divide (accuracy)
    o_ref[...] = jnp.where(zd >= 0.0, s, 1.0 - s).astype(o_ref.dtype)


def demo_forward(x, w, b, *, tb_rows=16384):
    """Forward pass of `demo`.

    x: [B, D] f32 activations.
    w: [2, D] f32 (PyTorch nn.Linear weight layout [out_features, in_features]).
    b: [2]    f32.
    Returns softmax(x @ w.T + b, axis=-1): [B, 2] f32.
    """
    B, D = x.shape

    # Rows packed per 128-lane vector row (lane-dense contraction). Falls back
    # to P=1 (plain [B, D] layout) when D does not divide 128.
    P = 128 // D if (D < 128 and 128 % D == 0) else 1

    # Pad batch to a multiple of P (only materializes a copy for awkward B).
    Bp = pl.cdiv(B, P) * P
    if Bp != B:
        x = jnp.pad(x, ((0, Bp - B), (0, 0)))
    B4 = Bp // P          # packed rows
    K = P * D             # packed lane width (=128 when P > 1)
    x_packed = x.astype(jnp.float32).reshape(B4, K)   # contiguous -> free

    # Signed-difference block-diagonal projection:
    #   W[:, 2r+c] holds (w[c] - w[1-c]) on lane segment [r*D, (r+1)*D).
    wdiff = (w[1] - w[0]).astype(jnp.float32)                # (D,)
    pair = jnp.stack([-wdiff, wdiff], axis=1)                # (D, 2)
    W = jnp.kron(jnp.eye(P, dtype=jnp.float32), pair)        # (K, 2P) block-diag
    bdiff = (b[1] - b[0]).astype(jnp.float32)
    bvec = jnp.tile(jnp.stack([-bdiff, bdiff]), P).reshape(1, 2 * P)

    # Batch tiling (in packed rows) with cdiv remainder handling.
    tb4 = max(1, tb_rows // P)
    tb4 = min(tb4, B4)
    if tb4 != B4:
        tb4 = max(8, (tb4 // 8) * 8)   # (8,128) sublane alignment for partial blocks
    grid = (pl.cdiv(B4, tb4),)

    out = pl.pallas_call(
        _packed_softmax_kernel,
        out_shape=jax.ShapeDtypeStruct((B4, 2 * P), jnp.float32),
        grid=grid,
        in_specs=[
            pl.BlockSpec((tb4, K), lambda i: (i, 0)),       # x: tiled over batch
            pl.BlockSpec((K, 2 * P), lambda i: (0, 0)),     # W: resident
            pl.BlockSpec((1, 2 * P), lambda i: (0, 0)),     # bias diffs: resident
        ],
        out_specs=pl.BlockSpec((tb4, 2 * P), lambda i: (i, 0)),
        compiler_params=pltpu.CompilerParams(
            # Batch tiles are independent -> shards across both TCs on v7x,
            # harmless on single-TC v5e/v6e.
            dimension_semantics=("parallel",),
            # Default tiles use ~8 MB VMEM (double-buffered, lane-padded out);
            # explicit limit keeps larger tb_rows safe across 16/32/32 MiB
            # scoped defaults of v5e/v6e/v7x.
            vmem_limit_bytes=32 * 1024 * 1024,
        ),
        cost_estimate=pl.CostEstimate(
            flops=2 * B4 * K * 2 * P,
            transcendentals=B4 * 2 * P,
            bytes_accessed=x_packed.size * 4 + W.size * 4 + B4 * 2 * P * 4,
        ),
    )(x_packed, W, bvec)

    # (B4, 2P) row-major == (Bp, 2) row-major: reshape is a free reinterpret.
    probs = out.reshape(Bp, 2)
    return probs[:B] if Bp != B else probs


if __name__ == "__main__":
    key = jax.random.PRNGKey(0)
    kx, kw, kb = jax.random.split(key, 3)

    batch, input_size = 16, 32
    bound = 1.0 / (input_size ** 0.5)
    # Deterministic params (mimics nn.Linear uniform(-1/sqrt(fan_in), ...)).
    w = jax.random.uniform(kw, (2, input_size), dtype=jnp.float32,
                           minval=-bound, maxval=bound)   # PyTorch [out, in]
    b = jax.random.uniform(kb, (2,), dtype=jnp.float32,
                           minval=-bound, maxval=bound)

    x = jax.random.normal(kx, (batch, input_size), dtype=jnp.float32)
    out = demo_forward(x, w, b)
    jax.block_until_ready(out)

    ref = jax.nn.softmax(x @ w.T + b, axis=-1)
    assert out.shape == (batch, 2)
    assert jnp.allclose(out, ref, atol=1e-5, rtol=1e-5)

    # Exercise (a) a ragged batch (pack-padding + full-extent block) and
    # (b) a multi-step grid with remainder tile (pipelined "parallel" path).
    for bsz, tbr in ((203, 16384), (256, 64)):
        x2 = jax.random.normal(jax.random.PRNGKey(1), (bsz, input_size),
                               dtype=jnp.float32)
        out2 = demo_forward(x2, w, b, tb_rows=tbr)
        jax.block_until_ready(out2)
        ref2 = jax.nn.softmax(x2 @ w.T + b, axis=-1)
        assert out2.shape == (bsz, 2)
        assert jnp.allclose(out2, ref2, atol=1e-5, rtol=1e-5)

    print("KERNEL_OK")
</pallas_src>

<mosaic_0001>
module attributes {stable_mosaic.version = 11 : i64} {
  func.func @_packed_softmax_kernel(%arg0: i32, %arg1: memref<4x128xf32, #tpu.memory_space<vmem>>, %arg2: memref<128x8xf32, #tpu.memory_space<vmem>>, %arg3: memref<1x8xf32, #tpu.memory_space<vmem>>, %arg4: memref<4x8xf32, #tpu.memory_space<vmem>>) attributes {dimension_semantics = [#tpu.dimension_semantics<parallel>], iteration_bounds = array<i64: 1>, scalar_prefetch = 0 : i64, scratch_operands = 0 : i64, tpu.core_type = #tpu.core_type<tc>, window_params = [{transform_indices = @transform_0, window_bounds = array<i64: 4, 128>}, {pipeline_mode = #tpu.pipeline_mode<synchronous>, transform_indices = @transform_1, window_bounds = array<i64: 128, 8>}, {pipeline_mode = #tpu.pipeline_mode<synchronous>, transform_indices = @transform_2, window_bounds = array<i64: 1, 8>}, {transform_indices = @transform_3, window_bounds = array<i64: 4, 8>}]} {
    %c0 = arith.constant 0 : index
    %c0_0 = arith.constant 0 : index
    %0 = vector.load %arg1[%c0, %c0_0] : memref<4x128xf32, #tpu.memory_space<vmem>>, vector<4x128xf32>
    %c0_1 = arith.constant 0 : index
    %c0_2 = arith.constant 0 : index
    %1 = vector.load %arg2[%c0_1, %c0_2] : memref<128x8xf32, #tpu.memory_space<vmem>>, vector<128x8xf32>
    %cst = arith.constant dense<0.000000e+00> : vector<4x8xf32>
    %2 = tpu.matmul %0, %1, %cst {dimension_numbers = #tpu.dot_dimension_numbers<[1], [0], [0], [1], [0, 0, 1, 1], [], []>} : vector<4x128xf32>, vector<128x8xf32>, vector<4x8xf32> -> vector<4x8xf32>
    %c0_3 = arith.constant 0 : index
    %c0_4 = arith.constant 0 : index
    %3 = vector.load %arg3[%c0_3, %c0_4] : memref<1x8xf32, #tpu.memory_space<vmem>>, vector<1x8xf32>
    %4 = vector.broadcast %3 : vector<1x8xf32> to vector<4x8xf32>
    %5 = arith.addf %2, %4 : vector<4x8xf32>
    %6 = math.absf %5 : vector<4x8xf32>
    %cst_5 = arith.constant 0.000000e+00 : f32
    %7 = vector.broadcast %cst_5 : f32 to vector<4x8xf32>
    %8 = arith.subf %7, %6 : vector<4x8xf32>
    %9 = math.exp %8 : vector<4x8xf32>
    %cst_6 = arith.constant 1.000000e+00 : f32
    %10 = vector.broadcast %cst_6 : f32 to vector<4x8xf32>
    %11 = arith.addf %10, %9 : vector<4x8xf32>
    %cst_7 = arith.constant 1.000000e+00 : f32
    %12 = vector.broadcast %cst_7 : f32 to vector<4x8xf32>
    %13 = arith.divf %12, %11 : vector<4x8xf32>
    %cst_8 = arith.constant 0.000000e+00 : f32
    %14 = vector.broadcast %cst_8 : f32 to vector<4x8xf32>
    %15 = arith.cmpf oge, %5, %14 : vector<4x8xf32>
    %cst_9 = arith.constant 1.000000e+00 : f32
    %16 = vector.broadcast %cst_9 : f32 to vector<4x8xf32>
    %17 = arith.subf %16, %13 : vector<4x8xf32>
    %18 = arith.select %15, %13, %17 : vector<4x8xi1>, vector<4x8xf32>
    %c0_10 = arith.constant 0 : index
    %c0_11 = arith.constant 0 : index
    %19 = vector.load %arg4[%c0_10, %c0_11] : memref<4x8xf32, #tpu.memory_space<vmem>>, vector<4x8xf32>
    tpu.vector_store %arg4[%c0_10, %c0_11], %18 {strides = array<i32>} : memref<4x8xf32, #tpu.memory_space<vmem>>, vector<4x8xf32>,
    return
  }
  func.func @transform_0(%arg0: i32) -> (i32, i32) {
    %c0_i32 = arith.constant 0 : i32
    %c0_i32_0 = arith.constant 0 : i32
    return %arg0, %c0_i32 : i32, i32
  }
  func.func @transform_1(%arg0: i32) -> (i32, i32) {
    %c0_i32 = arith.constant 0 : i32
    %c0_i32_0 = arith.constant 0 : i32
    %c0_i32_1 = arith.constant 0 : i32
    return %c0_i32, %c0_i32_0 : i32, i32
  }
  func.func @transform_2(%arg0: i32) -> (i32, i32) {
    %c0_i32 = arith.constant 0 : i32
    %c0_i32_0 = arith.constant 0 : i32
    %c0_i32_1 = arith.constant 0 : i32
    return %c0_i32, %c0_i32_0 : i32, i32
  }
  func.func @transform_3(%arg0: i32) -> (i32, i32) {
    %c0_i32 = arith.constant 0 : i32
    %c0_i32_0 = arith.constant 0 : i32
    return %arg0, %c0_i32 : i32, i32
  }
}

</mosaic_0001>

<llo_original>
// kernel: tpu_custom_call.1
$region0: #{tpu_custom_call.1}
  #allocation0 [shape = 'u32[]', space=smem, size = 0x4, offset = 0x4, fixed_abs, tag = 'smem constant byte address 0x4 - core index']
  #allocation1 [shape = 'u32[144,128]{1,0:T(1,128)}', space=vmem, size = 0x12000, scoped, tag = 'internal scratch']
  %s0 = inlined_call_operand.vmem [shape: f32[4,128], index: 0, kind: input, shape index: {}]
  %s1 = inlined_call_operand.vmem [shape: f32[128,8], index: 1, kind: input, shape index: {}]
  %s2 = inlined_call_operand.vmem [shape: f32[1,8], index: 2, kind: input, shape index: {}]
  %s3 = inlined_call_operand.hbm [shape: f32[4,8], index: 3, kind: output, shape index: {}]
  %s4 = sld [smem:[#allocation0]]
  $region22: #{tpu_custom_call.1} parent=0
    _
  %s6 = ssub.s32 1, %s4
  %s7 = scalar_select 0, %s6, %s4
  $region1: #{tpu_custom_call.1} parent=0
    #allocation2 [shape = 'u8[2048]{0}', space=vmem, size = 0x800, scoped, tag = 'output window, operand 0, single buffered']
    #allocation3 [shape = 's32[1]{0}', space=sflag, size = 0x4, scoped, tag = 'scoped memory for tpu_custom_call.1']
    %8 = vsyncpa [#allocation3], 0
    // Predicated region
    $region2: #{tpu_custom_call.1} parent=1 // pred_check
      _
    $region3: #{tpu_custom_call.1} parent=1 // pred_check_branch
      %10 = sbr.rel (0) target = $region5
    $region4: #{tpu_custom_call.1} parent=1 // pred_region
      _
    $region5: #{tpu_custom_call.1} parent=1 // pred_fallthru
      _
    // Predicated region
    $region6: #{tpu_custom_call.1} parent=1 // pred_check
      _
    $region7: #{tpu_custom_call.1} parent=1 // pred_check_branch
      %12 = sbr.rel (0) target = $region9
    $region8: #{tpu_custom_call.1} parent=1 // pred_region
      _
    $region9: #{tpu_custom_call.1} parent=1 // pred_fallthru
      _
    // Predicated region
    $region10: #{tpu_custom_call.1} parent=1 // pred_check
      _
    $region11: #{tpu_custom_call.1} parent=1 // pred_check_branch
      %14 = sbr.rel (0) target = $region13
    $region12: #{tpu_custom_call.1} parent=1 // pred_region
      _
    $region13: #{tpu_custom_call.1} parent=1 // pred_fallthru
      _
    %v15 = vld [vmem:[%s0] sm:$0xf]
    %v16 = vld [vmem:[%s1] sm:$0xff]
    %v17 = vld [vmem:[%s1 + $0x8] sm:$0xff]
    %v18 = vld [vmem:[%s1 + $0x10] sm:$0xff]
    %v19 = vld [vmem:[%s1 + $0x18] sm:$0xff]
    %v20 = vld [vmem:[%s1 + $0x20] sm:$0xff]
    %v21 = vld [vmem:[%s1 + $0x28] sm:$0xff]
    %v22 = vld [vmem:[%s1 + $0x30] sm:$0xff]
    %v23 = vld [vmem:[%s1 + $0x38] sm:$0xff]
    %v24 = vld [vmem:[%s1 + $0x40] sm:$0xff]
    %v25 = vld [vmem:[%s1 + $0x48] sm:$0xff]
    %v26 = vld [vmem:[%s1 + $0x50] sm:$0xff]
    %v27 = vld [vmem:[%s1 + $0x58] sm:$0xff]
    %v28 = vld [vmem:[%s1 + $0x60] sm:$0xff]
    %v29 = vld [vmem:[%s1 + $0x68] sm:$0xff]
    %v30 = vld [vmem:[%s1 + $0x70] sm:$0xff]
    %v31 = vld [vmem:[%s1 + $0x78] sm:$0xff]
    %v32 = vld [vmem:[%s2] sm:$0x1]
    %v34 = vlaneseq
    %v35 = vshrl.u32 %v34, 7
    %v36 = vsub.s32 0, %v35
    %v37 = vrot.slane %v32, %v36
    %39 = vmatprep.subr.mxu0 0.0
    %40 = vmatpush1.msra.mxu0 %v16
    %41 = vmatprep.subr.mxu0 0.0
    %42 = vmatpush1.msra.mxu0 %v17
    %43 = vmatprep.subr.mxu0 0.0
    %44 = vmatpush1.msra.mxu0 %v18
    %45 = vmatprep.subr.mxu0 0.0
    %46 = vmatpush1.msra.mxu0 %v19
    %47 = vmatprep.subr.mxu0 0.0
    %48 = vmatpush1.msra.mxu0 %v20
    %49 = vmatprep.subr.mxu0 0.0
    %50 = vmatpush1.msra.mxu0 %v21
    %51 = vmatprep.subr.mxu0 0.0
    %52 = vmatpush1.msra.mxu0 %v22
    %53 = vmatprep.subr.mxu0 0.0
    %54 = vmatpush1.msra.mxu0 %v23
    %55 = vmatprep.subr.mxu0 0.0
    %56 = vmatpush1.msra.mxu0 %v24
    %57 = vmatprep.subr.mxu0 0.0
    %58 = vmatpush1.msra.mxu0 %v25
    %59 = vmatprep.subr.mxu0 0.0
    %60 = vmatpush1.msra.mxu0 %v26
    %61 = vmatprep.subr.mxu0 0.0
    %62 = vmatpush1.msra.mxu0 %v27
    %63 = vmatprep.subr.mxu0 0.0
    %64 = vmatpush1.msra.mxu0 %v28
    %65 = vmatprep.subr.mxu0 0.0
    %66 = vmatpush1.msra.mxu0 %v29
    %67 = vmatprep.subr.mxu0 0.0
    %68 = vmatpush1.msra.mxu0 %v30
    %69 = vmatprep.subr.mxu0 0.0
    %70 = vmatpush1.msra.mxu0 %v31
    %71 = vmatprep.subr.mxu0 0.0
    %72 = vmatpush1.msra.mxu0 0.0
    %73 = vmatprep.subr.mxu0 0.0
    %74 = vmatpush1.msra.mxu0 0.0
    %75 = vmatprep.subr.mxu0 0.0
    %76 = vmatpush1.msra.mxu0 0.0
    %77 = vmatprep.subr.mxu0 0.0
    %78 = vmatpush1.msra.mxu0 0.0
    %79 = vmatprep.subr.mxu0 0.0
    %80 = vmatpush1.msra.mxu0 0.0
    %81 = vmatprep.subr.mxu0 0.0
    %82 = vmatpush1.msra.mxu0 0.0
    %83 = vmatprep.subr.mxu0 0.0
    %84 = vmatpush1.msra.mxu0 0.0
    %85 = vmatprep.subr.mxu0 0.0
    %86 = vmatpush1.msra.mxu0 0.0
    %87 = vmatprep.subr.mxu0 0.0
    %88 = vmatpush1.msra.mxu0 0.0
    %89 = vmatprep.subr.mxu0 0.0
    %90 = vmatpush1.msra.mxu0 0.0
    %91 = vmatprep.subr.mxu0 0.0
    %92 = vmatpush1.msra.mxu0 0.0
    %93 = vmatprep.subr.mxu0 0.0
    %94 = vmatpush1.msra.mxu0 0.0
    %95 = vmatprep.subr.mxu0 0.0
    %96 = vmatpush1.msra.mxu0 0.0
    %97 = vmatprep.subr.mxu0 0.0
    %98 = vmatpush1.msra.mxu0 0.0
    %99 = vmatprep.subr.mxu0 0.0
    %100 = vmatpush1.msra.mxu0 0.0
    %101 = vmatprep.subr.mxu0 0.0
    %102 = vmatpush1.msra.mxu0 0.0
    %103 = vmatprep.mubr.f32.mxu0 0.0
    %104 = vmatmul.mubr.f32.gmra.mrb[0].mxu0 %v15
    %v105 = vpop.f32.mrb[0].mxu0
    %v106 = vadd.f32 %v37, %v105
    %v107 = vpop.f32.mrb[0].mxu0
    %108 = vdwg.mxu0
    %v109 = vand.u32 2147483647, %v106
    %v110 = vsub.f32 0.0, %v109
    %v111 = vmul.f32 %v110, 1.442695
    %v112 = vpow.pop %v111
    %v113 = vadd.f32 %v112, 1.0
    %v114 = vrcp.pop %v113
    %v115 = vmul.f32 1.0, %v114
    %vm116 = vcmp.ge.f32.partialorder %v106, 0.0
    %v117 = vsub.f32 1.0, %v115
    %v118 = vsel %vm116, %v115, %v117
    %vm119 = vcmask 60416
    %120 = vst.msk [vmem:[#allocation2] sm:$0xf] %vm119, %v118
    // Predicated region
    $region14: #{tpu_custom_call.1} parent=1 // pred_check
      _
    $region15: #{tpu_custom_call.1} parent=1 // pred_check_branch
      %122 = sbr.rel (0) target = $region17
    $region16: #{tpu_custom_call.1} parent=1 // pred_region
      %s124 = ssub.s32 64, 64
      %125 = vsyncadd [#allocation3], %s124
      %s127 = sshll.u32 [#allocation2], 4
      %s128 = int_to_ptr.vmem [resolvable:$true] %s127
      %130 = dma.vmem_to_hbm [thread:$0]  %s128, 64, %s3, [#allocation3]
    $region17: #{tpu_custom_call.1} parent=1 // pred_fallthru
      _
    // Predicated region
    $region18: #{tpu_custom_call.1} parent=1 // pred_check
      _
    $region19: #{tpu_custom_call.1} parent=1 // pred_check_branch
      %132 = sbr.rel (0) target = $region21
    $region20: #{tpu_custom_call.1} parent=1 // pred_region
      %133 = dma.done [#allocation3], 64
    $region21: #{tpu_custom_call.1} parent=1 // pred_fallthru
      _
    %134 = vsyncpa [#allocation3], 1

</llo_original>
